<compile_context>
chip_gen: v6e
topology: v6e:2x2x1
jax: 0.10.0
libtpu: 0.0.40
codegen_flags: <defaults>
</compile_context>

<pallas_src>
import functools

import jax
import jax.numpy as jnp
from jax import lax
from jax.experimental import pallas as pl
from jax.experimental.pallas import tpu as pltpu

_LANE = 128
_SUBLANE = 8


def _round_up(v, m):
    return ((v + m - 1) // m) * m


def _noised_weighting_kernel(x_ref, w_ref, b_ref, *rest, noise_level):
    """One batch tile, transposed (lane-dense) layout.

    x_ref : VMEM (tm, D)   input rows, native dtype
    w_ref : VMEM (E, D)    Linear weight, torch layout (grid-resident)
    b_ref : VMEM (E, 1)    Linear bias as a column (grid-resident)
    n_ref : VMEM (E, tm)   N(0,1) noise tile (present iff noise_level != 0)
    o_ref : VMEM (E, tm)   softmax output, transposed (batch on lanes)
    """
    if noise_level != 0.0:
        n_ref, o_ref = rest
    else:
        (o_ref,) = rest

    # logits^T = W @ x^T -> (E, tm); contract the feature dim of both operands
    # so the batch tile stays on lanes.  Operands hit the MXU in their native
    # dtype (feed x in bf16 end-to-end to halve the dominant HBM read,
    # especially on v5e); accumulation is f32.
    logits = lax.dot_general(
        w_ref[...],
        x_ref[...],
        dimension_numbers=(((1,), (1,)), ((), ())),
        preferred_element_type=jnp.float32,
    )
    logits = logits + b_ref[...].astype(jnp.float32)  # (E,1) broadcast over lanes

    if noise_level != 0.0:
        logits = logits + n_ref[...].astype(jnp.float32) * jnp.float32(noise_level)

    # Numerically stable softmax over the expert axis (sublanes).  Each batch
    # row lives in one lane, so the reduction is a cheap sublane reduce.
    z = logits - jnp.max(logits, axis=0, keepdims=True)
    e = jnp.exp(z)
    o_ref[...] = (e / jnp.sum(e, axis=0, keepdims=True)).astype(o_ref.dtype)


def _pick_batch_tile(B, D, E, x_item, out_item, noise_item, has_noise,
                     block_b, vmem_budget):
    """Pick (tm, padded_B) with a lane-padding-aware VMEM model."""
    if B <= block_b:
        # Single tile: block == full array dims, no (8,128) divisibility or
        # padding requirements.
        return B, B

    d_pad = _round_up(D, _LANE)        # (tm, D) f32 block occupies d_pad lanes
    e_pad = _round_up(E, _SUBLANE)

    def tile_bytes(tm):
        x_blk = tm * d_pad * x_item                       # x tile (lane-padded)
        o_blk = e_pad * tm * out_item                     # output tile
        n_blk = e_pad * tm * noise_item if has_noise else 0
        w_res = e_pad * d_pad * 4 + e_pad * _LANE * 4     # resident W, bias
        scratch = 4 * e_pad * tm * 4                      # f32 logits/z/e/out
        return 2 * (x_blk + o_blk + n_blk) + w_res + scratch  # 2x = double buffer

    tm = max(_LANE, (block_b // _LANE) * _LANE)  # lane-dense output tiles
    while tm > _LANE and tile_bytes(tm) > vmem_budget:
        tm -= _LANE
    Bp = pl.cdiv(B, tm) * tm
    return tm, Bp


def noised_weighting_network(x, weight, bias, *, noise_level=0.1, key=None,
                             out_dtype=jnp.bfloat16, block_b=8192,
                             transpose_output=True):
    """Forward pass of NoisedWeightingNetwork.

    x:      [B, D]   (any float dtype; pass bf16 end-to-end to halve HBM reads)
    weight: [E, D]   torch nn.Linear layout (NOT transposed by the wrapper)
    bias:   [E]
    key:    jax PRNG key for the Gaussian noise (required semantics when
            noise_level != 0; defaults to PRNGKey(0)).
    Returns softmax(x @ weight.T + bias + N(0,1)*noise_level, axis=-1) as
    [B, E] (or the kernel-native lane-dense [E, B] if transpose_output=False).
    """
    B, D = x.shape
    E, D2 = weight.shape
    assert D2 == D, "weight must be [num_experts, input_dim]"

    has_noise = float(noise_level) != 0.0
    noise_dtype = jnp.bfloat16
    x_item = jnp.dtype(x.dtype).itemsize
    out_item = jnp.dtype(out_dtype).itemsize
    noise_item = jnp.dtype(noise_dtype).itemsize

    # ---- batch tile selection (lane-padding-aware VMEM budget) -------------
    tm, Bp = _pick_batch_tile(
        B, D, E, x_item, out_item, noise_item, has_noise, block_b,
        vmem_budget=24 * 1024 * 1024)  # headroom under the 32 MiB scoped limit

    if Bp != B:
        # Zero-pad the batch; padded lanes compute softmax(bias [+ noise]) and
        # are sliced off below (softmax reduces over sublanes, i.e. per-lane).
        x = jnp.pad(x, ((0, Bp - B), (0, 0)))

    b_col = bias.reshape(E, 1)
    grid = (Bp // tm,)

    in_specs = [
        pl.BlockSpec((tm, D), lambda i: (i, 0)),   # x batch tile
        pl.BlockSpec((E, D), lambda i: (0, 0)),    # weight (grid-resident)
        pl.BlockSpec((E, 1), lambda i: (0, 0)),    # bias   (grid-resident)
    ]
    operands = [x, weight, b_col]

    if has_noise:
        if key is None:
            key = jax.random.PRNGKey(0)
        # N(0,1) noise drawn once in the kernel's transposed lane-dense layout
        # (bf16: tiny HBM stream vs x); realization is tiling-independent.
        noise = jax.random.normal(key, (E, Bp), dtype=noise_dtype)
        in_specs.append(pl.BlockSpec((E, tm), lambda i: (0, i)))
        operands.append(noise)

    kernel = functools.partial(_noised_weighting_kernel,
                               noise_level=float(noise_level))

    # Advisory cost: this op is memory-bound (MXU shape E=8/D=32 is irrelevant).
    bytes_accessed = (Bp * D * x_item
                      + (E * D + E) * jnp.dtype(weight.dtype).itemsize
                      + Bp * E * out_item
                      + (Bp * E * noise_item if has_noise else 0))
    cost = pl.CostEstimate(flops=int(2 * Bp * E * D),
                           transcendentals=int(Bp * E),
                           bytes_accessed=int(bytes_accessed))

    out_t = pl.pallas_call(
        kernel,
        out_shape=jax.ShapeDtypeStruct((E, Bp), out_dtype),
        grid=grid,
        in_specs=in_specs,
        out_specs=pl.BlockSpec((E, tm), lambda i: (0, i)),
        compiler_params=pltpu.CompilerParams(
            dimension_semantics=("parallel",),   # shard batch tiles across TCs
            vmem_limit_bytes=32 * 1024 * 1024,   # safe on v7x; raise on v5e/v6e
        ),
        cost_estimate=cost,
    )(*operands)

    out_t = out_t[:, :B]
    if transpose_output:
        # Tiny layout fix-up to match the module's [B, E] return; prefer
        # transpose_output=False when the consumer can take [E, B] directly.
        return out_t.T
    return out_t


if __name__ == "__main__":
    # Small shapes consistent with the module: batch=8, input_dim=32, experts=8.
    B, D, E = 8, 32, 8
    noise_level = 0.1

    key = jax.random.PRNGKey(0)
    kx, kw, kb, kn, kx2 = jax.random.split(key, 5)

    x = jax.random.normal(kx, (B, D), dtype=jnp.float32)

    # Deterministic parameter init (torch Linear shapes: W [E, D], b [E]).
    bound = 1.0 / jnp.sqrt(jnp.float32(D))
    weight = jax.random.uniform(kw, (E, D), minval=-bound, maxval=bound,
                                dtype=jnp.float32)
    bias = jax.random.uniform(kb, (E,), minval=-bound, maxval=bound,
                              dtype=jnp.float32)

    # 1) Deterministic check (noise_level=0, f32 output): module math vs JAX.
    out_clean = jax.block_until_ready(
        noised_weighting_network(x, weight, bias, noise_level=0.0,
                                 out_dtype=jnp.float32))
    ref = jax.nn.softmax(x @ weight.T + bias, axis=-1)
    assert out_clean.shape == (B, E)
    assert jnp.allclose(out_clean, ref, atol=1e-2, rtol=1e-2), \
        "mismatch vs reference (no noise)"

    # 2) Noised forward (default bf16 routing weights), full module semantics.
    out = jax.block_until_ready(
        noised_weighting_network(x, weight, bias, noise_level=noise_level,
                                 key=kn))
    assert out.shape == (B, E)
    outf = out.astype(jnp.float32)
    assert bool(jnp.all(jnp.isfinite(outf)))
    assert jnp.allclose(jnp.sum(outf, axis=-1), 1.0, atol=2e-2)
    assert bool(jnp.all((outf >= 0.0) & (outf <= 1.0 + 1e-3)))
    # Noise actually perturbs the routing weights.
    assert not bool(jnp.allclose(outf, out_clean, atol=1e-4))

    # 3) Multi-tile path (grid > 1, padded batch); noise off for exact compare.
    B2 = 300
    x2 = jax.random.normal(kx2, (B2, D), dtype=jnp.float32)
    out2 = jax.block_until_ready(
        noised_weighting_network(x2, weight, bias, noise_level=0.0,
                                 out_dtype=jnp.float32, block_b=128))
    ref2 = jax.nn.softmax(x2 @ weight.T + bias, axis=-1)
    assert out2.shape == (B2, E)
    assert jnp.allclose(out2, ref2, atol=1e-2, rtol=1e-2), \
        "mismatch vs reference (tiled/padded batch)"

    print("KERNEL_OK")
</pallas_src>

<mosaic_0001>
module attributes {stable_mosaic.version = 11 : i64} {
  func.func @_noised_weighting_kernel(%arg0: i32, %arg1: memref<8x32xf32, #tpu.memory_space<vmem>>, %arg2: memref<8x32xf32, #tpu.memory_space<vmem>>, %arg3: memref<8x1xf32, #tpu.memory_space<vmem>>, %arg4: memref<8x8xf32, #tpu.memory_space<vmem>>) attributes {dimension_semantics = [#tpu.dimension_semantics<parallel>], iteration_bounds = array<i64: 1>, scalar_prefetch = 0 : i64, scratch_operands = 0 : i64, tpu.core_type = #tpu.core_type<tc>, window_params = [{transform_indices = @transform_0, window_bounds = array<i64: 8, 32>}, {pipeline_mode = #tpu.pipeline_mode<synchronous>, transform_indices = @transform_1, window_bounds = array<i64: 8, 32>}, {pipeline_mode = #tpu.pipeline_mode<synchronous>, transform_indices = @transform_2, window_bounds = array<i64: 8, 1>}, {transform_indices = @transform_3, window_bounds = array<i64: 8, 8>}]} {
    %c0 = arith.constant 0 : index
    %c0_0 = arith.constant 0 : index
    %0 = vector.load %arg2[%c0, %c0_0] : memref<8x32xf32, #tpu.memory_space<vmem>>, vector<8x32xf32>
    %c0_1 = arith.constant 0 : index
    %c0_2 = arith.constant 0 : index
    %1 = vector.load %arg1[%c0_1, %c0_2] : memref<8x32xf32, #tpu.memory_space<vmem>>, vector<8x32xf32>
    %cst = arith.constant dense<0.000000e+00> : vector<8x8xf32>
    %2 = tpu.matmul %0, %1, %cst {dimension_numbers = #tpu.dot_dimension_numbers<[1], [1], [0], [0], [0, 0, 1, 0], [], []>} : vector<8x32xf32>, vector<8x32xf32>, vector<8x8xf32> -> vector<8x8xf32>
    %c0_3 = arith.constant 0 : index
    %c0_4 = arith.constant 0 : index
    %3 = vector.load %arg3[%c0_3, %c0_4] : memref<8x1xf32, #tpu.memory_space<vmem>>, vector<8x1xf32>
    %4 = vector.broadcast %3 : vector<8x1xf32> to vector<8x8xf32>
    %5 = arith.addf %2, %4 : vector<8x8xf32>
    %cst_5 = arith.constant dense<0xFF800000> : vector<8xf32>
    %6 = vector.multi_reduction <maximumf>, %5, %cst_5 [0] : vector<8x8xf32> to vector<8xf32>
    %7 = vector.shape_cast %6 : vector<8xf32> to vector<1x8xf32>
    %8 = vector.broadcast %7 : vector<1x8xf32> to vector<8x8xf32>
    %9 = arith.subf %5, %8 : vector<8x8xf32>
    %10 = math.exp %9 : vector<8x8xf32>
    %cst_6 = arith.constant dense<0.000000e+00> : vector<8xf32>
    %11 = vector.multi_reduction <add>, %10, %cst_6 [0] : vector<8x8xf32> to vector<8xf32>
    %12 = vector.shape_cast %11 : vector<8xf32> to vector<1x8xf32>
    %13 = vector.broadcast %12 : vector<1x8xf32> to vector<8x8xf32>
    %14 = arith.divf %10, %13 : vector<8x8xf32>
    %c0_7 = arith.constant 0 : index
    %c0_8 = arith.constant 0 : index
    %15 = vector.load %arg4[%c0_7, %c0_8] : memref<8x8xf32, #tpu.memory_space<vmem>>, vector<8x8xf32>
    tpu.vector_store %arg4[%c0_7, %c0_8], %14 {strides = array<i32>} : memref<8x8xf32, #tpu.memory_space<vmem>>, vector<8x8xf32>,
    return
  }
  func.func @transform_0(%arg0: i32) -> (i32, i32) {
    %c0_i32 = arith.constant 0 : i32
    %c0_i32_0 = arith.constant 0 : i32
    return %arg0, %c0_i32 : i32, i32
  }
  func.func @transform_1(%arg0: i32) -> (i32, i32) {
    %c0_i32 = arith.constant 0 : i32
    %c0_i32_0 = arith.constant 0 : i32
    %c0_i32_1 = arith.constant 0 : i32
    return %c0_i32, %c0_i32_0 : i32, i32
  }
  func.func @transform_2(%arg0: i32) -> (i32, i32) {
    %c0_i32 = arith.constant 0 : i32
    %c0_i32_0 = arith.constant 0 : i32
    %c0_i32_1 = arith.constant 0 : i32
    return %c0_i32, %c0_i32_0 : i32, i32
  }
  func.func @transform_3(%arg0: i32) -> (i32, i32) {
    %c0_i32 = arith.constant 0 : i32
    %c0_i32_0 = arith.constant 0 : i32
    return %c0_i32, %arg0 : i32, i32
  }
}

</mosaic_0001>

<llo_original>
// kernel: tpu_custom_call.1
$region0: #{tpu_custom_call.1}
  #allocation0 [shape = 'u32[]', space=smem, size = 0x4, offset = 0x4, fixed_abs, tag = 'smem constant byte address 0x4 - core index']
  #allocation1 [shape = 'u32[144,128]{1,0:T(1,128)}', space=vmem, size = 0x12000, scoped, tag = 'internal scratch']
  %s0 = inlined_call_operand.vmem [shape: f32[8,32], index: 0, kind: input, shape index: {}]
  %s1 = inlined_call_operand.hbm [shape: f32[8,32], index: 1, kind: input, shape index: {}]
  %s2 = inlined_call_operand.vmem [shape: f32[8,1], index: 2, kind: input, shape index: {}]
  %s3 = inlined_call_operand.hbm [shape: f32[8,8], index: 3, kind: output, shape index: {}]
  %s4 = sld [smem:[#allocation0]]
  $region26: #{tpu_custom_call.1} parent=0
    _
  %s6 = ssub.s32 1, %s4
  %s7 = scalar_select 0, %s6, %s4
  $region1: #{tpu_custom_call.1} parent=0
    #allocation2 [shape = 'u8[4096]{0}', space=vmem, size = 0x1000, scoped, tag = 'input window, operand 1, single buffered']
    #allocation3 [shape = 's32[1]{0}', space=sflag, size = 0x4, scoped, tag = 'scoped memory for tpu_custom_call.1']
    #allocation4 [shape = 's32[1]{0}', space=sflag, size = 0x4, scoped, tag = 'scoped memory for tpu_custom_call.1']
    #allocation5 [shape = 'u8[4096]{0}', space=vmem, size = 0x1000, scoped, tag = 'output window, operand 0, single buffered']
    %8 = vsyncpa [#allocation3], 0
    %9 = vsyncpa [#allocation4], 0
    // Predicated region
    $region2: #{tpu_custom_call.1} parent=1 // pred_check
      _
    $region3: #{tpu_custom_call.1} parent=1 // pred_check_branch
      %11 = sbr.rel (0) target = $region5
    $region4: #{tpu_custom_call.1} parent=1 // pred_region
      _
    $region5: #{tpu_custom_call.1} parent=1 // pred_fallthru
      _
    // Predicated region
    $region6: #{tpu_custom_call.1} parent=1 // pred_check
      _
    $region7: #{tpu_custom_call.1} parent=1 // pred_check_branch
      %13 = sbr.rel (0) target = $region9
    $region8: #{tpu_custom_call.1} parent=1 // pred_region
      %s15 = ssub.s32 128, 128
      %16 = vsyncadd [#allocation3], %s15
      %s18 = sshll.u32 [#allocation2], 4
      %s19 = int_to_ptr.vmem [resolvable:$true] %s18
      %21 = dma.hbm_to_vmem [thread:$0]  %s1, 128, %s19, [#allocation3]
    $region9: #{tpu_custom_call.1} parent=1 // pred_fallthru
      _
    // Predicated region
    $region10: #{tpu_custom_call.1} parent=1 // pred_check
      _
    $region11: #{tpu_custom_call.1} parent=1 // pred_check_branch
      %23 = sbr.rel (0) target = $region13
    $region12: #{tpu_custom_call.1} parent=1 // pred_region
      _
    $region13: #{tpu_custom_call.1} parent=1 // pred_fallthru
      _
    // Predicated region
    $region14: #{tpu_custom_call.1} parent=1 // pred_check
      _
    $region15: #{tpu_custom_call.1} parent=1 // pred_check_branch
      %25 = sbr.rel (0) target = $region17
    $region16: #{tpu_custom_call.1} parent=1 // pred_region
      %26 = dma.done [#allocation3], 128
    $region17: #{tpu_custom_call.1} parent=1 // pred_fallthru
      _
    %v27 = vld [vmem:[#allocation2] sm:$0xff]
    %v28 = vld [vmem:[%s0] sm:$0xff]
    %v29 = vld [vmem:[%s2] sm:$0xff]
    %31 = vset.pattern.permute.xlu0 0
    %32 = vperm.xlu0 %31, %v29
    %v33 = vpop.permute.xlu0 %32
    %vm35 = vcmask 261120
    %v37 = vsel %vm35, %v27, 0
    %v40 = vsel %vm35, %v28, 0
    %42 = vmatprep.subr.mxu0 0.0
    %43 = vmatpush1.xpose.msra.mxu0 0.0
    %44 = vmatprep.subr.mxu0 0.0
    %45 = vmatpush1.xpose.msra.mxu0 0.0
    %46 = vmatprep.subr.mxu0 0.0
    %47 = vmatpush1.xpose.msra.mxu0 0.0
    %48 = vmatprep.subr.mxu0 0.0
    %49 = vmatpush1.xpose.msra.mxu0 0.0
    %50 = vmatprep.subr.mxu0 0.0
    %51 = vmatpush1.xpose.msra.mxu0 0.0
    %52 = vmatprep.subr.mxu0 0.0
    %53 = vmatpush1.xpose.msra.mxu0 0.0
    %54 = vmatprep.subr.mxu0 0.0
    %55 = vmatpush1.xpose.msra.mxu0 0.0
    %56 = vmatprep.subr.mxu0 0.0
    %57 = vmatpush1.xpose.msra.mxu0 0.0
    %58 = vmatprep.subr.mxu0 0.0
    %59 = vmatpush1.xpose.msra.mxu0 0.0
    %60 = vmatprep.subr.mxu0 0.0
    %61 = vmatpush1.xpose.msra.mxu0 0.0
    %62 = vmatprep.subr.mxu0 0.0
    %63 = vmatpush1.xpose.msra.mxu0 0.0
    %64 = vmatprep.subr.mxu0 0.0
    %65 = vmatpush1.xpose.msra.mxu0 0.0
    %66 = vmatprep.subr.mxu0 0.0
    %67 = vmatpush1.xpose.msra.mxu0 0.0
    %68 = vmatprep.subr.mxu0 0.0
    %69 = vmatpush1.xpose.msra.mxu0 0.0
    %70 = vmatprep.subr.mxu0 0.0
    %71 = vmatpush1.xpose.msra.mxu0 0.0
    %72 = vmatprep.subr.mxu0 0.0
    %73 = vmatpush1.xpose.msra.mxu0 %v40
    %74 = vmatprep.subr.mxu0 0.0
    %75 = vmatpush2.xpose.msra.mxu0 0.0
    %76 = vmatprep.subr.mxu0 0.0
    %77 = vmatpush2.xpose.msra.mxu0 0.0
    %78 = vmatprep.subr.mxu0 0.0
    %79 = vmatpush2.xpose.msra.mxu0 0.0
    %80 = vmatprep.subr.mxu0 0.0
    %81 = vmatpush2.xpose.msra.mxu0 0.0
    %82 = vmatprep.subr.mxu0 0.0
    %83 = vmatpush2.xpose.msra.mxu0 0.0
    %84 = vmatprep.subr.mxu0 0.0
    %85 = vmatpush2.xpose.msra.mxu0 0.0
    %86 = vmatprep.subr.mxu0 0.0
    %87 = vmatpush2.xpose.msra.mxu0 0.0
    %88 = vmatprep.subr.mxu0 0.0
    %89 = vmatpush2.xpose.msra.mxu0 0.0
    %90 = vmatprep.subr.mxu0 0.0
    %91 = vmatpush2.xpose.msra.mxu0 0.0
    %92 = vmatprep.subr.mxu0 0.0
    %93 = vmatpush2.xpose.msra.mxu0 0.0
    %94 = vmatprep.subr.mxu0 0.0
    %95 = vmatpush2.xpose.msra.mxu0 0.0
    %96 = vmatprep.subr.mxu0 0.0
    %97 = vmatpush2.xpose.msra.mxu0 0.0
    %98 = vmatprep.subr.mxu0 0.0
    %99 = vmatpush2.xpose.msra.mxu0 0.0
    %100 = vmatprep.subr.mxu0 0.0
    %101 = vmatpush2.xpose.msra.mxu0 0.0
    %102 = vmatprep.subr.mxu0 0.0
    %103 = vmatpush2.xpose.msra.mxu0 0.0
    %104 = vmatprep.subr.mxu0 0.0
    %105 = vmatpush2.xpose.msra.mxu0 0.0
    %106 = vmatprep.mubr.f32.mxu0 0.0
    %107 = vmatmul.mubr.f32.gmra.mxu0 %v37
    %v108 = vpop.f32.mrf.mxu0
    %v109 = vadd.f32 %v33, %v108
    %v110 = vpop.f32.mrf.mxu0
    %111 = vdwg.mxu0
    %vm112 = vcmask 64512
    %v113 = vsel %vm112, %v109, -inf
    %v114 = vrot.slane %v113, 4
    %v115 = vmax.f32 %v113, %v114
    %v116 = vrot.slane %v115, 2
    %v117 = vmax.f32 %v115, %v116
    %v118 = vrot.slane %v117, 1
    %v119 = vmax.f32 %v117, %v118
    %v120 = vsub.f32 %v109, %v119
    %v121 = vmul.f32 %v120, 1.442695
    %v122 = vpow.pop %v121
    %v123 = vsel %vm112, %v122, 0.0
    %v124 = vrot.slane %v123, 4
    %v125 = vadd.f32 %v123, %v124
    %v126 = vrot.slane %v125, 2
    %v127 = vadd.f32 %v125, %v126
    %v128 = vrot.slane %v127, 1
    %v129 = vadd.f32 %v127, %v128
    %v130 = vrcp.pop %v129
    %v131 = vmul.f32 %v122, %v130
    %132 = vst.msk [vmem:[#allocation5] sm:$0xff] %vm112, %v131
    // Predicated region
    $region18: #{tpu_custom_call.1} parent=1 // pred_check
      _
    $region19: #{tpu_custom_call.1} parent=1 // pred_check_branch
      %134 = sbr.rel (0) target = $region21
    $region20: #{tpu_custom_call.1} parent=1 // pred_region
      %s136 = ssub.s32 128, 128
      %137 = vsyncadd [#allocation4], %s136
      %s139 = sshll.u32 [#allocation5], 4
      %s140 = int_to_ptr.vmem [resolvable:$true] %s139
      %142 = dma.vmem_to_hbm [thread:$0]  %s140, 128, %s3, [#allocation4]
    $region21: #{tpu_custom_call.1} parent=1 // pred_fallthru
      _
    // Predicated region
    $region22: #{tpu_custom_call.1} parent=1 // pred_check
      _
    $region23: #{tpu_custom_call.1} parent=1 // pred_check_branch
      %144 = sbr.rel (0) target = $region25
    $region24: #{tpu_custom_call.1} parent=1 // pred_region
      %145 = dma.done [#allocation4], 128
    $region25: #{tpu_custom_call.1} parent=1 // pred_fallthru
      _
    %146 = vsyncpa [#allocation3], 1
    %147 = vsyncpa [#allocation4], 1

</llo_original>
